<compile_context>
chip_gen: v7x
topology: tpu7x:2x2x1
jax: 0.10.0
libtpu: 0.0.40
codegen_flags: <defaults>
</compile_context>

<pallas_src>
import math
import functools
import numpy as np
import jax
import jax.numpy as jnp
from jax.experimental import pallas as pl
from jax.experimental.pallas import tpu as pltpu


def _bilinear_matrix(in_size: int, out_size: int) -> np.ndarray:
    """1-D interpolation matrix M (out,in): y = M @ x reproduces
    F.interpolate(mode='bilinear', align_corners=False) along one axis."""
    scale = in_size / out_size
    o = np.arange(out_size)
    src = (o + 0.5) * scale - 0.5
    src = np.maximum(src, 0.0)                    # PyTorch clamps negative coords to 0
    i0 = np.minimum(np.floor(src).astype(np.int64), in_size - 1)
    i1 = np.minimum(i0 + 1, in_size - 1)
    w1 = (src - i0).astype(np.float32)
    w0 = (1.0 - w1).astype(np.float32)
    m = np.zeros((out_size, in_size), np.float32)
    m[o, i0] += w0
    m[o, i1] += w1
    return m


def _upsample_conv_kernel(x_ref, uh_ref, rbig_ref, bias_ref, o_ref, *, C, O, H, W):
    # x_ref:    (H, C*W)        one batch element, layout x2[h, c*W + w] = x[c, h, w]
    # uh_ref:   (2H+2, H)       height-upsample matrix with zero first/last row (conv pad)
    # rbig_ref: (3, C*W, O*2W)  per-row-tap matrices: width-upsample (+pad) fused with conv taps
    # bias_ref: (1, O*2W)       lane-packed bias
    # o_ref:    (2H, O*2W)      lane-dense packed output: out[i, o*2W + j]
    H2, W2 = 2 * H, 2 * W
    f32 = jnp.float32

    # MXU #1: height upsample + zero pad rows; channels/width stay packed along lanes.
    z = jnp.dot(uh_ref[...], x_ref[...], preferred_element_type=f32)        # (2H+2, C*W)

    # MXU #2-4: width upsample + 3x3 conv (channel contraction, dj taps, zero pad cols)
    # folded into one matmul per row-tap di; bias added once.
    acc = jnp.broadcast_to(bias_ref[...], (H2, O * W2)).astype(f32)
    for di in range(3):
        acc = acc + jnp.dot(z[di:di + H2, :], rbig_ref[di],
                            preferred_element_type=f32)
    o_ref[...] = acc.astype(o_ref.dtype)


def upsample_forward(x, w, b):
    """x: (N,C,H,W) f32, w: (O,C,3,3) f32 (OIHW, O==C), b: (O,) f32 -> (N,O,2H,2W) f32."""
    N, C, H, W = x.shape
    O = w.shape[0]
    H2, W2 = 2 * H, 2 * W
    Hp, Wp = H2 + 2, W2 + 2

    # Host-side constant interpolation matrices (conv padding=1 folded in as zero borders).
    uh = _bilinear_matrix(H, H2)                                             # (2H, H)
    uw = _bilinear_matrix(W, W2)                                             # (2W, W)
    zH = np.zeros((1, H), np.float32)
    zW = np.zeros((1, W), np.float32)
    uh_pad = np.concatenate([zH, uh, zH], axis=0)                            # (Hp, H)
    uwT_pad = np.ascontiguousarray(np.concatenate([zW, uw, zW], axis=0).T)   # (W, Wp)
    # Shifted width windows for the three column taps dj=0..2: (3, W, 2W).
    wwin = np.stack([uwT_pad[:, dj:dj + W2] for dj in range(3)], axis=0)

    w = jnp.asarray(w, jnp.float32)
    b = jnp.asarray(b, jnp.float32)
    # rbig[di, c*W + w_in, o*W2 + j] = sum_dj uwT_pad[w_in, j+dj] * w[o, c, di, dj]
    rbig = jnp.einsum('dwj,ocid->icwoj', jnp.asarray(wwin), w).reshape(3, C * W, O * W2)
    bpack = jnp.repeat(b, W2)[None, :]                                       # (1, O*W2)

    # Channels packed along lanes: x2[n, h, c*W + w] = x[n, c, h, w].
    x2 = jnp.transpose(jnp.asarray(x, jnp.float32), (0, 2, 1, 3)).reshape(N, H, C * W)

    kern = functools.partial(_upsample_conv_kernel, C=C, O=O, H=H, W=W)
    out_packed = pl.pallas_call(
        kern,
        out_shape=jax.ShapeDtypeStruct((N, H2, O * W2), jnp.float32),
        grid=(N,),
        in_specs=[
            pl.BlockSpec((None, H, C * W), lambda n: (n, 0, 0)),     # x2, per-batch block
            pl.BlockSpec((Hp, H), lambda n: (0, 0)),                 # height interp (+pad rows)
            pl.BlockSpec((3, C * W, O * W2), lambda n: (0, 0, 0)),   # fused width/conv matrices
            pl.BlockSpec((1, O * W2), lambda n: (0, 0)),             # lane-packed bias
        ],
        out_specs=pl.BlockSpec((None, H2, O * W2), lambda n: (n, 0, 0)),
        compiler_params=pltpu.CompilerParams(dimension_semantics=("parallel",)),
    )(x2, jnp.asarray(uh_pad), rbig, bpack)

    # Un-pack lanes: (N, H2, O*W2) -> (N, O, H2, W2)  (plain XLA reshape/transpose in the wrapper).
    return jnp.transpose(out_packed.reshape(N, H2, O, W2), (0, 2, 1, 3))


def _reference(x, w, b):
    """Pure-JAX reference: same bilinear semantics + lax conv (NCHW/OIHW)."""
    N, C, H, W = x.shape
    uh = jnp.asarray(_bilinear_matrix(H, 2 * H))
    uw = jnp.asarray(_bilinear_matrix(W, 2 * W))
    up = jnp.einsum('ph,nchw->ncpw', uh, x)
    up = jnp.einsum('qw,ncpw->ncpq', uw, up)
    out = jax.lax.conv_general_dilated(
        up, w, window_strides=(1, 1), padding=((1, 1), (1, 1)),
        dimension_numbers=('NCHW', 'OIHW', 'NCHW'))
    return out + b[None, :, None, None]


if __name__ == "__main__":
    N, C, H, W = 2, 4, 16, 16
    key = jax.random.PRNGKey(0)
    kx, kw, kb = jax.random.split(key, 3)
    x = jax.random.normal(kx, (N, C, H, W), jnp.float32)

    # Deterministic parameter init (mimics Conv2d default uniform bound; not a checkpoint).
    bound = 1.0 / math.sqrt(C * 3 * 3)
    w = jax.random.uniform(kw, (C, C, 3, 3), jnp.float32, -bound, bound)
    b = jax.random.uniform(kb, (C,), jnp.float32, -bound, bound)

    out = jax.block_until_ready(upsample_forward(x, w, b))
    ref = _reference(x, w, b)
    np.testing.assert_allclose(np.asarray(out), np.asarray(ref), rtol=1e-4, atol=1e-4)
    print("KERNEL_OK")
</pallas_src>

<mosaic_0001>
module attributes {stable_mosaic.version = 11 : i64} {
  func.func @_upsample_conv_kernel(%arg0: i32, %arg1: memref<1x16x64xf32, #tpu.memory_space<vmem>>, %arg2: memref<34x16xf32, #tpu.memory_space<vmem>>, %arg3: memref<3x64x128xf32, #tpu.memory_space<vmem>>, %arg4: memref<1x128xf32, #tpu.memory_space<vmem>>, %arg5: memref<1x32x128xf32, #tpu.memory_space<vmem>>) attributes {dimension_semantics = [#tpu.dimension_semantics<parallel>], iteration_bounds = array<i64: 2>, scalar_prefetch = 0 : i64, scratch_operands = 0 : i64, tpu.core_type = #tpu.core_type<tc>, window_params = [{transform_indices = @transform_0, window_bounds = array<i64: 1, 16, 64>}, {pipeline_mode = #tpu.pipeline_mode<synchronous>, transform_indices = @transform_1, window_bounds = array<i64: 34, 16>}, {pipeline_mode = #tpu.pipeline_mode<synchronous>, transform_indices = @transform_2, window_bounds = array<i64: 3, 64, 128>}, {pipeline_mode = #tpu.pipeline_mode<synchronous>, transform_indices = @transform_3, window_bounds = array<i64: 1, 128>}, {transform_indices = @transform_4, window_bounds = array<i64: 1, 32, 128>}]} {
    %c0 = arith.constant 0 : index
    %c0_0 = arith.constant 0 : index
    %0 = vector.load %arg2[%c0, %c0_0] : memref<34x16xf32, #tpu.memory_space<vmem>>, vector<34x16xf32>
    %c0_1 = arith.constant 0 : index
    %c0_2 = arith.constant 0 : index
    %c0_3 = arith.constant 0 : index
    %1 = vector.load %arg1[%c0_1, %c0_2, %c0_3] : memref<1x16x64xf32, #tpu.memory_space<vmem>>, vector<1x16x64xf32>
    %2 = vector.shape_cast %1 : vector<1x16x64xf32> to vector<16x64xf32>
    %cst = arith.constant dense<0.000000e+00> : vector<34x64xf32>
    %3 = tpu.matmul %0, %2, %cst {dimension_numbers = #tpu.dot_dimension_numbers<[1], [0], [0], [1], [0, 0, 1, 1], [], []>} : vector<34x16xf32>, vector<16x64xf32>, vector<34x64xf32> -> vector<34x64xf32>
    %c0_4 = arith.constant 0 : index
    %c0_5 = arith.constant 0 : index
    %4 = vector.load %arg4[%c0_4, %c0_5] : memref<1x128xf32, #tpu.memory_space<vmem>>, vector<1x128xf32>
    %5 = vector.shape_cast %4 : vector<1x128xf32> to vector<1x128xf32>
    %6 = vector.broadcast %5 : vector<1x128xf32> to vector<32x128xf32>
    %7 = vector.extract_strided_slice %3 {offsets = [0, 0], sizes = [32, 64], strides = [1, 1]} : vector<34x64xf32> to vector<32x64xf32>
    %c0_6 = arith.constant 0 : index
    %c0_7 = arith.constant 0 : index
    %c0_8 = arith.constant 0 : index
    %8 = vector.load %arg3[%c0_6, %c0_7, %c0_8] : memref<3x64x128xf32, #tpu.memory_space<vmem>>, vector<1x64x128xf32>
    %9 = vector.shape_cast %8 : vector<1x64x128xf32> to vector<64x128xf32>
    %cst_9 = arith.constant dense<0.000000e+00> : vector<32x128xf32>
    %10 = tpu.matmul %7, %9, %cst_9 {dimension_numbers = #tpu.dot_dimension_numbers<[1], [0], [0], [1], [0, 0, 1, 1], [], []>} : vector<32x64xf32>, vector<64x128xf32>, vector<32x128xf32> -> vector<32x128xf32>
    %11 = arith.addf %6, %10 : vector<32x128xf32>
    %12 = vector.extract_strided_slice %3 {offsets = [1, 0], sizes = [32, 64], strides = [1, 1]} : vector<34x64xf32> to vector<32x64xf32>
    %c1 = arith.constant 1 : index
    %c0_10 = arith.constant 0 : index
    %c0_11 = arith.constant 0 : index
    %13 = vector.load %arg3[%c1, %c0_10, %c0_11] : memref<3x64x128xf32, #tpu.memory_space<vmem>>, vector<1x64x128xf32>
    %14 = vector.shape_cast %13 : vector<1x64x128xf32> to vector<64x128xf32>
    %cst_12 = arith.constant dense<0.000000e+00> : vector<32x128xf32>
    %15 = tpu.matmul %12, %14, %cst_12 {dimension_numbers = #tpu.dot_dimension_numbers<[1], [0], [0], [1], [0, 0, 1, 1], [], []>} : vector<32x64xf32>, vector<64x128xf32>, vector<32x128xf32> -> vector<32x128xf32>
    %16 = arith.addf %11, %15 : vector<32x128xf32>
    %17 = vector.extract_strided_slice %3 {offsets = [2, 0], sizes = [32, 64], strides = [1, 1]} : vector<34x64xf32> to vector<32x64xf32>
    %c2 = arith.constant 2 : index
    %c0_13 = arith.constant 0 : index
    %c0_14 = arith.constant 0 : index
    %18 = vector.load %arg3[%c2, %c0_13, %c0_14] : memref<3x64x128xf32, #tpu.memory_space<vmem>>, vector<1x64x128xf32>
    %19 = vector.shape_cast %18 : vector<1x64x128xf32> to vector<64x128xf32>
    %cst_15 = arith.constant dense<0.000000e+00> : vector<32x128xf32>
    %20 = tpu.matmul %17, %19, %cst_15 {dimension_numbers = #tpu.dot_dimension_numbers<[1], [0], [0], [1], [0, 0, 1, 1], [], []>} : vector<32x64xf32>, vector<64x128xf32>, vector<32x128xf32> -> vector<32x128xf32>
    %21 = arith.addf %16, %20 : vector<32x128xf32>
    %c0_16 = arith.constant 0 : index
    %c0_17 = arith.constant 0 : index
    %c0_18 = arith.constant 0 : index
    %22 = vector.load %arg5[%c0_16, %c0_17, %c0_18] : memref<1x32x128xf32, #tpu.memory_space<vmem>>, vector<1x32x128xf32>
    %23 = vector.shape_cast %22 : vector<1x32x128xf32> to vector<32x128xf32>
    %24 = vector.shape_cast %21 : vector<32x128xf32> to vector<1x32x128xf32>
    tpu.vector_store %arg5[%c0_16, %c0_17, %c0_18], %24 {strides = array<i32>} : memref<1x32x128xf32, #tpu.memory_space<vmem>>, vector<1x32x128xf32>,
    return
  }
  func.func @transform_0(%arg0: i32) -> (i32, i32, i32) {
    %c0_i32 = arith.constant 0 : i32
    %c0_i32_0 = arith.constant 0 : i32
    %c0_i32_1 = arith.constant 0 : i32
    return %arg0, %c0_i32, %c0_i32_0 : i32, i32, i32
  }
  func.func @transform_1(%arg0: i32) -> (i32, i32) {
    %c0_i32 = arith.constant 0 : i32
    %c0_i32_0 = arith.constant 0 : i32
    %c0_i32_1 = arith.constant 0 : i32
    return %c0_i32, %c0_i32_0 : i32, i32
  }
  func.func @transform_2(%arg0: i32) -> (i32, i32, i32) {
    %c0_i32 = arith.constant 0 : i32
    %c0_i32_0 = arith.constant 0 : i32
    %c0_i32_1 = arith.constant 0 : i32
    %c0_i32_2 = arith.constant 0 : i32
    return %c0_i32, %c0_i32_0, %c0_i32_1 : i32, i32, i32
  }
  func.func @transform_3(%arg0: i32) -> (i32, i32) {
    %c0_i32 = arith.constant 0 : i32
    %c0_i32_0 = arith.constant 0 : i32
    %c0_i32_1 = arith.constant 0 : i32
    return %c0_i32, %c0_i32_0 : i32, i32
  }
  func.func @transform_4(%arg0: i32) -> (i32, i32, i32) {
    %c0_i32 = arith.constant 0 : i32
    %c0_i32_0 = arith.constant 0 : i32
    %c0_i32_1 = arith.constant 0 : i32
    return %arg0, %c0_i32, %c0_i32_0 : i32, i32, i32
  }
}

</mosaic_0001>

<llo_original>
// kernel: tpu_custom_call.1
$region0: #{tpu_custom_call.1}
  #allocation0 [shape = 'u32[]', space=smem, size = 0x4, offset = 0x4, fixed_abs, tag = 'smem constant byte address 0x4 - core index']
  #allocation1 [shape = 'u32[144,128]{1,0:T(1,128)}', space=vmem, size = 0x12000, scoped, tag = 'internal scratch']
  %s0 = inlined_call_operand.vmem [shape: f32[2,16,64], index: 0, kind: input, shape index: {}]
  %s1 = inlined_call_operand.vmem [shape: f32[34,16], index: 1, kind: input, shape index: {}]
  %s2 = inlined_call_operand.hbm [shape: f32[3,64,128], index: 2, kind: input, shape index: {}]
  %s3 = inlined_call_operand.vmem [shape: f32[1,128], index: 3, kind: input, shape index: {}]
  %s4 = inlined_call_operand.hbm [shape: f32[2,32,128], index: 4, kind: output, shape index: {}]
  %s5 = sld [smem:[#allocation0]]
  $region53: #{tpu_custom_call.1} parent=0
    _
  %s7 = ssub.s32 1, %s5
  %s8 = scalar_select 0, %s7, %s5
  $region1: #{tpu_custom_call.1} parent=0
    #allocation2 [shape = 'u8[98304]{0}', space=vmem, size = 0x18000, scoped, tag = 'input window, operand 2, single buffered']
    #allocation3 [shape = 's32[2]{0}', space=sflag, size = 0x8, scoped, tag = 'scoped memory for tpu_custom_call.1']
    #allocation4 [shape = 's32[2]{0}', space=sflag, size = 0x8, scoped, tag = 'scoped memory for tpu_custom_call.1']
    #allocation5 [shape = 'u8[32768]{0}', space=vmem, size = 0x8000, scoped, tag = 'output window, operand 0']
    %9 = vsyncpa [#allocation3], 0
    %10 = vsyncpa [#allocation4], 0
    %s11 = scalar_lea.sflag [#allocation4], 1
    %12 = vsyncpa %s11, 0
    loop: start=0, step=1, limit=4
    $region2: #{tpu_custom_call.1} parent=1 // loop_pre_header
      _
    $region3: #{tpu_custom_call.1} parent=1 // loop_header
      %s14 = sphi 0, %s18
      %p15 = scmp.ge.s32.totalorder %s14, 4
      %s24 = sphi 0, %s26
      %s27 = sphi 0, %s24
      %s28 = sphi 0, %s27
      %s44 = sphi 0, %s28
      %s48 = sphi 0, %s48
      %s50 = sphi 0, %s48
      %s51 = sphi 0, %s50
      %s65 = sphi 0, %s51
      %s69 = sphi 0, %s69
      %s71 = sphi 0, %s69
      %s72 = sphi 0, %s71
      %s86 = sphi 0, %s72
      %s90 = sphi 0, %s90
      %s92 = sphi 0, %s90
      %s93 = sphi 0, %s92
      %s107 = sphi 0, %s93
      %s113 = sphi 0, %s115
      %s116 = sphi 0, %s113
      %s117 = sphi 0, %s116
      %s133 = sphi 0, %s117
    $region4: #{tpu_custom_call.1} parent=1 // loop_header_branch
      %17 = sbr.rel (%p15) target = $region8
    $region5: #{tpu_custom_call.1} parent=1 // loop_body
      %s19 = ssub.s32 %s14, 1
      %s20 = ssub.s32 %s14, 2
      %s21 = sadd.s32 %s14, 1
      %s22 = ssub.s32 %s14, %s21
      %p23 = scmp.eq.s32.totalorder %s22, 0
      %s25 = sadd.s32 %s24, 1
      %s26 = scalar_select %p23, %s24, %s25
      %p29 = pneg %p23
      %p30 = scmp.eq.s32.totalorder %s14, 1
      %p31 = por %p29, %p30
      %p32 = scmp.ne.s32.totalorder %s24, %s27
      %p33 = scmp.eq.s32.totalorder %s14, 0
      %p34 = por %p32, %p33
      %p35 = scmp.ne.s32.totalorder %s24, %s27
      %p36 = scmp.eq.s32.totalorder %s19, 1
      %p37 = por %p35, %p36
      %p38 = scmp.ne.s32.totalorder %s27, %s28
      %p39 = scmp.eq.s32.totalorder %s19, 0
      %p40 = por %p38, %p39
      %p41 = scmp.ne.s32.totalorder %s27, %s28
      %p42 = scmp.eq.s32.totalorder %s20, 1
      %p43 = por %p41, %p42
      %p45 = scmp.ne.s32.totalorder %s28, %s44
      %p46 = scmp.eq.s32.totalorder %s20, 0
      %p47 = por %p45, %p46
      %s49 = sadd.s32 %s48, 1
      %p52 = scmp.eq.s32.totalorder %s14, 1
      %p53 = scmp.ne.s32.totalorder %s48, %s50
      %p54 = scmp.eq.s32.totalorder %s14, 0
      %p55 = por %p53, %p54
      %p56 = scmp.ne.s32.totalorder %s48, %s50
      %p57 = scmp.eq.s32.totalorder %s19, 1
      %p58 = por %p56, %p57
      %p59 = scmp.ne.s32.totalorder %s50, %s51
      %p60 = scmp.eq.s32.totalorder %s19, 0
      %p61 = por %p59, %p60
      %p62 = scmp.ne.s32.totalorder %s50, %s51
      %p63 = scmp.eq.s32.totalorder %s20, 1
      %p64 = por %p62, %p63
      %p66 = scmp.ne.s32.totalorder %s51, %s65
      %p67 = scmp.eq.s32.totalorder %s20, 0
      %p68 = por %p66, %p67
      %s70 = sadd.s32 %s69, 1
      %p73 = scmp.eq.s32.totalorder %s14, 1
      %p74 = scmp.ne.s32.totalorder %s69, %s71
      %p75 = scmp.eq.s32.totalorder %s14, 0
      %p76 = por %p74, %p75
      %p77 = scmp.ne.s32.totalorder %s69, %s71
      %p78 = scmp.eq.s32.totalorder %s19, 1
      %p79 = por %p77, %p78
      %p80 = scmp.ne.s32.totalorder %s71, %s72
      %p81 = scmp.eq.s32.totalorder %s19, 0
      %p82 = por %p80, %p81
      %p83 = scmp.ne.s32.totalorder %s71, %s72
      %p84 = scmp.eq.s32.totalorder %s20, 1
      %p85 = por %p83, %p84
      %p87 = scmp.ne.s32.totalorder %s72, %s86
      %p88 = scmp.eq.s32.totalorder %s20, 0
      %p89 = por %p87, %p88
      %s91 = sadd.s32 %s90, 1
      %p94 = scmp.eq.s32.totalorder %s14, 1
      %p95 = scmp.ne.s32.totalorder %s90, %s92
      %p96 = scmp.eq.s32.totalorder %s14, 0
      %p97 = por %p95, %p96
      %p98 = scmp.ne.s32.totalorder %s90, %s92
      %p99 = scmp.eq.s32.totalorder %s19, 1
      %p100 = por %p98, %p99
      %p101 = scmp.ne.s32.totalorder %s92, %s93
      %p102 = scmp.eq.s32.totalorder %s19, 0
      %p103 = por %p101, %p102
      %p104 = scmp.ne.s32.totalorder %s92, %s93
      %p105 = scmp.eq.s32.totalorder %s20, 1
      %p106 = por %p104, %p105
      %p108 = scmp.ne.s32.totalorder %s93, %s107
      %p109 = scmp.eq.s32.totalorder %s20, 0
      %p110 = por %p108, %p109
      %s111 = ssub.s32 %s14, %s21
      %p112 = scmp.eq.s32.totalorder %s111, 0
      %s114 = sadd.s32 %s113, 1
      %s115 = scalar_select %p112, %s113, %s114
      %p118 = pneg %p112
      %p119 = scmp.eq.s32.totalorder %s14, 1
      %p120 = por %p118, %p119
      %p121 = scmp.ne.s32.totalorder %s113, %s116
      %p122 = scmp.eq.s32.totalorder %s14, 0
      %p123 = por %p121, %p122
      %p124 = scmp.ne.s32.totalorder %s113, %s116
      %p125 = scmp.eq.s32.totalorder %s19, 1
      %p126 = por %p124, %p125
      %p127 = scmp.ne.s32.totalorder %s116, %s117
      %p128 = scmp.eq.s32.totalorder %s19, 0
      %p129 = por %p127, %p128
      %p130 = scmp.ne.s32.totalorder %s116, %s117
      %p131 = scmp.eq.s32.totalorder %s20, 1
      %p132 = por %p130, %p131
      %p134 = scmp.ne.s32.totalorder %s117, %s133
      %p135 = scmp.eq.s32.totalorder %s20, 0
      %p136 = por %p134, %p135
      %p137 = scmp.le.s32.totalorder 1, %s14
      %p138 = scmp.lt.s32.totalorder %s14, 3
      %p139 = pnand %p137, %p138
      %p140 = pneg %p139
      // Predicated region
      $region9: #{tpu_custom_call.1} parent=5 // pred_check
        _
      $region10: #{tpu_custom_call.1} parent=5 // pred_check_branch
        %142 = sbr.rel (%p139) target = $region12
      $region11: #{tpu_custom_call.1} parent=5 // pred_region
        %s143 = ssub.s32 %s14, 1
        // Predicated region
        $region13: #{tpu_custom_call.1} parent=11 // pred_check
          %p144 = pneg %p61
        $region14: #{tpu_custom_call.1} parent=11 // pred_check_branch
          %146 = sbr.rel (%p144) target = $region16
        $region15: #{tpu_custom_call.1} parent=11 // pred_region
          _
        $region16: #{tpu_custom_call.1} parent=11 // pred_fallthru
          _
        // Predicated region
        $region17: #{tpu_custom_call.1} parent=11 // pred_check
          %p147 = pneg %p82
        $region18: #{tpu_custom_call.1} parent=11 // pred_check_branch
          %149 = sbr.rel (%p147) target = $region20
        $region19: #{tpu_custom_call.1} parent=11 // pred_region
          %s151 = ssub.s32 3072, 3072
          %152 = vsyncadd [#allocation3], %s151
          %s153 = sshll.u32 [#allocation2], 4
          %s154 = int_to_ptr.vmem [resolvable:$true] %s153
          %159 = dma.hbm_to_vmem [thread:$0]  %s2, 3072, %s154, [#allocation3], 128, 128, 8
        $region20: #{tpu_custom_call.1} parent=11 // pred_fallthru
          _
        // Predicated region
        $region21: #{tpu_custom_call.1} parent=11 // pred_check
          %p160 = pneg %p103
        $region22: #{tpu_custom_call.1} parent=11 // pred_check_branch
          %162 = sbr.rel (%p160) target = $region24
        $region23: #{tpu_custom_call.1} parent=11 // pred_region
          _
        $region24: #{tpu_custom_call.1} parent=11 // pred_fallthru
          _
      $region12: #{tpu_custom_call.1} parent=5 // pred_fallthru
        _
      %p163 = scmp.lt.s32.totalorder %s14, 2
      // Predicated region
      $region25: #{tpu_custom_call.1} parent=5 // pred_check
        %p164 = pneg %p163
      $region26: #{tpu_custom_call.1} parent=5 // pred_check_branch
        %166 = sbr.rel (%p164) target = $region28
      $region27: #{tpu_custom_call.1} parent=5 // pred_region
        // Predicated region
        $region29: #{tpu_custom_call.1} parent=27 // pred_check
          %p167 = pneg %p34
        $region30: #{tpu_custom_call.1} parent=27 // pred_check_branch
          %169 = sbr.rel (%p167) target = $region32
        $region31: #{tpu_custom_call.1} parent=27 // pred_region
          %p170 = scmp.lt.s32.totalorder %s14, 1
          %s171 = scalar_select %p170, %s14, 1
          %s172 = smul.addr %s171, 2
          %s173 = smul.addr %s172, 8
          %s174 = scalar_lea.vmem %s0, %s173
        $region32: #{tpu_custom_call.1} parent=27 // pred_fallthru
          _
      $region28: #{tpu_custom_call.1} parent=5 // pred_fallthru
        _
      %p175 = scmp.le.s32.totalorder 1, %s14
      %p176 = scmp.lt.s32.totalorder %s14, 3
      %p177 = pnand %p175, %p176
      %p178 = pneg %p177
      // Predicated region
      $region33: #{tpu_custom_call.1} parent=5 // pred_check
        _
      $region34: #{tpu_custom_call.1} parent=5 // pred_check_branch
        %180 = sbr.rel (%p177) target = $region36
      $region35: #{tpu_custom_call.1} parent=5 // pred_region
        %s181 = ssub.s32 %s14, 1
        // Predicated region
        $region37: #{tpu_custom_call.1} parent=35 // pred_check
          %p182 = pneg %p82
        $region38: #{tpu_custom_call.1} parent=35 // pred_check_branch
          %184 = sbr.rel (%p182) target = $region40
        $region39: #{tpu_custom_call.1} parent=35 // pred_region
          %185 = dma.done [#allocation3], 3072
        $region40: #{tpu_custom_call.1} parent=35 // pred_fallthru
          _
        %p186 = scmp.lt.s32.totalorder %s19, 1
        %s187 = scalar_select %p186, %s19, 1
        %s188 = smul.addr %s187, 2
        %s189 = smul.addr %s188, 8
        %s190 = scalar_lea.vmem %s0, %s189
        %p191 = pneg %p40
        %p192 = pneg %p37
        %p193 = pneg %p61
        %p194 = pneg %p58
        %p195 = pneg %p82
        %p196 = pneg %p79
        %p197 = pneg %p103
        %p198 = pneg %p100
        %p199 = pneg %p129
        %p200 = pneg %p126
        %s201 = sand.u32 %s116, 1
        %s202 = scalar_lea.sflag [#allocation4], %s201
        %s203 = sand.u32 %s116, 1
        %s204 = smul.addr %s203, 32
        %s205 = scalar_lea.vmem [#allocation5], %s204
        %p206 = scmp.lt.s32.totalorder %s19, 1
        %s207 = scalar_select %p206, %s19, 1
        %s208 = smul.addr %s207, 2
        %s209 = smul.addr %s208, 8
        %s210 = scalar_lea.vmem %s0, %s209
        %v211 = vld [vmem:[%s1] sm:$0xff]
        %v212 = vld [vmem:[%s1 + $0x8] sm:$0xff]
        %v213 = vld [vmem:[%s1 + $0x10] sm:$0xff]
        %v214 = vld [vmem:[%s1 + $0x18] sm:$0xff]
        %v215 = vld [vmem:[%s1 + $0x20] sm:$0x3]
        %v216 = vld [vmem:[%s210] sm:$0xff]
        %v217 = vld [vmem:[%s210 + $0x8] sm:$0xff]
        %vm218 = vcmask 130048
        %v220 = vsel %vm218, %v211, 0
        %v223 = vsel %vm218, %v212, 0
        %v226 = vsel %vm218, %v213, 0
        %v229 = vsel %vm218, %v214, 0
        %v232 = vsel %vm218, %v215, 0
        %234 = vmatprep.subr.mxu0 0.0
        %235 = vmatpush1.msra.mxu0 %v216
        %236 = vmatprep.subr.mxu0 0.0
        %237 = vmatpush1.msra.mxu0 %v217
        %238 = vmatprep.subr.mxu0 0.0
        %239 = vmatpush1.msra.mxu0 0.0
        %240 = vmatprep.subr.mxu0 0.0
        %241 = vmatpush1.msra.mxu0 0.0
        %242 = vmatprep.subr.mxu0 0.0
        %243 = vmatpush1.msra.mxu0 0.0
        %244 = vmatprep.subr.mxu0 0.0
        %245 = vmatpush1.msra.mxu0 0.0
        %246 = vmatprep.subr.mxu0 0.0
        %247 = vmatpush1.msra.mxu0 0.0
        %248 = vmatprep.subr.mxu0 0.0
        %249 = vmatpush1.msra.mxu0 0.0
        %250 = vmatprep.subr.mxu0 0.0
        %251 = vmatpush1.msra.mxu0 0.0
        %252 = vmatprep.subr.mxu0 0.0
        %253 = vmatpush1.msra.mxu0 0.0
        %254 = vmatprep.subr.mxu0 0.0
        %255 = vmatpush1.msra.mxu0 0.0
        %256 = vmatprep.subr.mxu0 0.0
        %257 = vmatpush1.msra.mxu0 0.0
        %258 = vmatprep.subr.mxu0 0.0
        %259 = vmatpush1.msra.mxu0 0.0
        %260 = vmatprep.subr.mxu0 0.0
        %261 = vmatpush1.msra.mxu0 0.0
        %262 = vmatprep.subr.mxu0 0.0
        %263 = vmatpush1.msra.mxu0 0.0
        %264 = vmatprep.subr.mxu0 0.0
        %265 = vmatpush1.msra.mxu0 0.0
        %266 = vmatprep.subr.mxu0 0.0
        %267 = vmatpush1.msra.mxu0 0.0
        %268 = vmatprep.subr.mxu0 0.0
        %269 = vmatpush1.msra.mxu0 0.0
        %270 = vmatprep.subr.mxu0 0.0
        %271 = vmatpush1.msra.mxu0 0.0
        %272 = vmatprep.subr.mxu0 0.0
        %273 = vmatpush1.msra.mxu0 0.0
        %274 = vmatprep.subr.mxu0 0.0
        %275 = vmatpush1.msra.mxu0 0.0
        %276 = vmatprep.subr.mxu0 0.0
        %277 = vmatpush1.msra.mxu0 0.0
        %278 = vmatprep.subr.mxu0 0.0
        %279 = vmatpush1.msra.mxu0 0.0
        %280 = vmatprep.subr.mxu0 0.0
        %281 = vmatpush1.msra.mxu0 0.0
        %282 = vmatprep.subr.mxu0 0.0
        %283 = vmatpush1.msra.mxu0 0.0
        %284 = vmatprep.subr.mxu0 0.0
        %285 = vmatpush1.msra.mxu0 0.0
        %286 = vmatprep.subr.mxu0 0.0
        %287 = vmatpush1.msra.mxu0 0.0
        %288 = vmatprep.subr.mxu0 0.0
        %289 = vmatpush1.msra.mxu0 0.0
        %290 = vmatprep.subr.mxu0 0.0
        %291 = vmatpush1.msra.mxu0 0.0
        %292 = vmatprep.subr.mxu0 0.0
        %293 = vmatpush1.msra.mxu0 0.0
        %294 = vmatprep.subr.mxu0 0.0
        %295 = vmatpush1.msra.mxu0 0.0
        %296 = vmatprep.subr.mxu0 0.0
        %297 = vmatpush1.msra.mxu0 0.0
        %298 = vmatprep.mubr.f32.mxu0 0.0
        %299 = vmatmul.mubr.f32.gmra.mrb[0].mxu0 %v220
        %v300 = vpop.f32.mrb[0].mxu0
        %v301 = vadd.f32 0.0, %v300
        %v302 = vpop.f32.mrb[0].mxu0
        %303 = vmatprep.mubr.f32.mxu0 0.0
        %304 = vmatmul.mubr.f32.gmra.mrb[0].mxu0 %v223
        %v305 = vpop.f32.mrb[0].mxu0
        %v306 = vadd.f32 0.0, %v305
        %v307 = vpop.f32.mrb[0].mxu0
        %308 = vmatprep.mubr.f32.mxu0 0.0
        %309 = vmatmul.mubr.f32.gmra.mrb[0].mxu0 %v226
        %v310 = vpop.f32.mrb[0].mxu0
        %v311 = vadd.f32 0.0, %v310
        %v312 = vpop.f32.mrb[0].mxu0
        %313 = vmatprep.mubr.f32.mxu0 0.0
        %314 = vmatmul.mubr.f32.gmra.mrb[0].mxu0 %v229
        %v315 = vpop.f32.mrb[0].mxu0
        %v316 = vadd.f32 0.0, %v315
        %v317 = vpop.f32.mrb[0].mxu0
        %318 = vmatprep.mubr.f32.mxu0 0.0
        %319 = vmatmul.mubr.f32.gmra.mrb[0].mxu0 %v232
        %v320 = vpop.f32.mrb[0].mxu0
        %v321 = vadd.f32 0.0, %v320
        %v322 = vpop.f32.mrb[0].mxu0
        %323 = vdwg.mxu0
        %v324 = vld [vmem:[%s3] sm:$0x1]
        %v326 = vlaneseq
        %v327 = vshrl.u32 %v326, 7
        %v328 = vsub.s32 0, %v327
        %v329 = vrot.slane %v324, %v328
        %v331 = vld [vmem:[#allocation2] sm:$0xff]
        %v332 = vld [vmem:[#allocation2 + $0x8] sm:$0xff]
        %v333 = vld [vmem:[#allocation2 + $0x10] sm:$0xff]
        %v334 = vld [vmem:[#allocation2 + $0x18] sm:$0xff]
        %v335 = vld [vmem:[#allocation2 + $0x20] sm:$0xff]
        %v336 = vld [vmem:[#allocation2 + $0x28] sm:$0xff]
        %v337 = vld [vmem:[#allocation2 + $0x30] sm:$0xff]
        %v338 = vld [vmem:[#allocation2 + $0x38] sm:$0xff]
        %vm339 = vcmask 523264
        %v341 = vsel %vm339, %v301, 0
        %v344 = vsel %vm339, %v306, 0
        %v347 = vsel %vm339, %v311, 0
        %v350 = vsel %vm339, %v316, 0
        %352 = vmatprep.subr.mxu0 0.0
        %353 = vmatpush1.msra.mxu0 %v331
        %354 = vmatprep.subr.mxu0 0.0
        %355 = vmatpush1.msra.mxu0 %v332
        %356 = vmatprep.subr.mxu0 0.0
        %357 = vmatpush1.msra.mxu0 %v333
        %358 = vmatprep.subr.mxu0 0.0
        %359 = vmatpush1.msra.mxu0 %v334
        %360 = vmatprep.subr.mxu0 0.0
        %361 = vmatpush1.msra.mxu0 %v335
        %362 = vmatprep.subr.mxu0 0.0
        %363 = vmatpush1.msra.mxu0 %v336
        %364 = vmatprep.subr.mxu0 0.0
        %365 = vmatpush1.msra.mxu0 %v337
        %366 = vmatprep.subr.mxu0 0.0
        %367 = vmatpush1.msra.mxu0 %v338
        %368 = vmatprep.subr.mxu0 0.0
        %369 = vmatpush1.msra.mxu0 0.0
        %370 = vmatprep.subr.mxu0 0.0
        %371 = vmatpush1.msra.mxu0 0.0
        %372 = vmatprep.subr.mxu0 0.0
        %373 = vmatpush1.msra.mxu0 0.0
        %374 = vmatprep.subr.mxu0 0.0
        %375 = vmatpush1.msra.mxu0 0.0
        %376 = vmatprep.subr.mxu0 0.0
        %377 = vmatpush1.msra.mxu0 0.0
        %378 = vmatprep.subr.mxu0 0.0
        %379 = vmatpush1.msra.mxu0 0.0
        %380 = vmatprep.subr.mxu0 0.0
        %381 = vmatpush1.msra.mxu0 0.0
        %382 = vmatprep.subr.mxu0 0.0
        %383 = vmatpush1.msra.mxu0 0.0
        %384 = vmatprep.subr.mxu0 0.0
        %385 = vmatpush1.msra.mxu0 0.0
        %386 = vmatprep.subr.mxu0 0.0
        %387 = vmatpush1.msra.mxu0 0.0
        %388 = vmatprep.subr.mxu0 0.0
        %389 = vmatpush1.msra.mxu0 0.0
        %390 = vmatprep.subr.mxu0 0.0
        %391 = vmatpush1.msra.mxu0 0.0
        %392 = vmatprep.subr.mxu0 0.0
        %393 = vmatpush1.msra.mxu0 0.0
        %394 = vmatprep.subr.mxu0 0.0
        %395 = vmatpush1.msra.mxu0 0.0
        %396 = vmatprep.subr.mxu0 0.0
        %397 = vmatpush1.msra.mxu0 0.0
        %398 = vmatprep.subr.mxu0 0.0
        %399 = vmatpush1.msra.mxu0 0.0
        %400 = vmatprep.subr.mxu0 0.0
        %401 = vmatpush1.msra.mxu0 0.0
        %402 = vmatprep.subr.mxu0 0.0
        %403 = vmatpush1.msra.mxu0 0.0
        %404 = vmatprep.subr.mxu0 0.0
        %405 = vmatpush1.msra.mxu0 0.0
        %406 = vmatprep.subr.mxu0 0.0
        %407 = vmatpush1.msra.mxu0 0.0
        %408 = vmatprep.subr.mxu0 0.0
        %409 = vmatpush1.msra.mxu0 0.0
        %410 = vmatprep.subr.mxu0 0.0
        %411 = vmatpush1.msra.mxu0 0.0
        %412 = vmatprep.subr.mxu0 0.0
        %413 = vmatpush1.msra.mxu0 0.0
        %414 = vmatprep.subr.mxu0 0.0
        %415 = vmatpush1.msra.mxu0 0.0
        %416 = vmatprep.mubr.f32.mxu0 0.0
        %417 = vmatmul.mubr.f32.gmra.mrb[0].mxu0 %v341
        %v418 = vpop.f32.mrb[0].mxu0
        %v419 = vadd.f32 0.0, %v418
        %v420 = vpop.f32.mrb[0].mxu0
        %421 = vmatprep.mubr.f32.mxu0 0.0
        %422 = vmatmul.mubr.f32.gmra.mrb[0].mxu0 %v344
        %v423 = vpop.f32.mrb[0].mxu0
        %v424 = vadd.f32 0.0, %v423
        %v425 = vpop.f32.mrb[0].mxu0
        %426 = vmatprep.mubr.f32.mxu0 0.0
        %427 = vmatmul.mubr.f32.gmra.mrb[0].mxu0 %v347
        %v428 = vpop.f32.mrb[0].mxu0
        %v429 = vadd.f32 0.0, %v428
        %v430 = vpop.f32.mrb[0].mxu0
        %431 = vmatprep.mubr.f32.mxu0 0.0
        %432 = vmatmul.mubr.f32.gmra.mrb[0].mxu0 %v350
        %v433 = vpop.f32.mrb[0].mxu0
        %v434 = vadd.f32 0.0, %v433
        %v435 = vpop.f32.mrb[0].mxu0
        %436 = vdwg.mxu0
        %v437 = vadd.f32 %v329, %v419
        %v438 = vadd.f32 %v329, %v424
        %v439 = vadd.f32 %v329, %v429
        %v440 = vadd.f32 %v329, %v434
        %s441 = scalar_lea.vmem [#allocation2], 64
        %v442 = vld [vmem:[%s441] sm:$0xff]
        %v443 = vld [vmem:[%s441 + $0x8] sm:$0xff]
        %v444 = vld [vmem:[%s441 + $0x10] sm:$0xff]
        %v445 = vld [vmem:[%s441 + $0x18] sm:$0xff]
        %v446 = vld [vmem:[%s441 + $0x20] sm:$0xff]
        %v447 = vld [vmem:[%s441 + $0x28] sm:$0xff]
        %v448 = vld [vmem:[%s441 + $0x30] sm:$0xff]
        %v449 = vld [vmem:[%s441 + $0x38] sm:$0xff]
        %vm451 = vcmask 1046528
        %v452 = vrot.slane %v301, 1
        %v453 = vrot.slane %v306, 1
        %v454 = vsel %vm451, %v452, %v453
        %v455 = vrot.slane %v311, 1
        %v456 = vsel %vm451, %v453, %v455
        %v457 = vrot.slane %v316, 1
        %v458 = vsel %vm451, %v455, %v457
        %v459 = vrot.slane %v321, 1
        %v460 = vsel %vm451, %v457, %v459
        %v461 = vsel %vm339, %v454, 0
        %v463 = vsel %vm339, %v456, 0
        %v465 = vsel %vm339, %v458, 0
        %v467 = vsel %vm339, %v460, 0
        %469 = vmatprep.subr.mxu0 0.0
        %470 = vmatpush1.msra.mxu0 %v442
        %471 = vmatprep.subr.mxu0 0.0
        %472 = vmatpush1.msra.mxu0 %v443
        %473 = vmatprep.subr.mxu0 0.0
        %474 = vmatpush1.msra.mxu0 %v444
        %475 = vmatprep.subr.mxu0 0.0
        %476 = vmatpush1.msra.mxu0 %v445
        %477 = vmatprep.subr.mxu0 0.0
        %478 = vmatpush1.msra.mxu0 %v446
        %479 = vmatprep.subr.mxu0 0.0
        %480 = vmatpush1.msra.mxu0 %v447
        %481 = vmatprep.subr.mxu0 0.0
        %482 = vmatpush1.msra.mxu0 %v448
        %483 = vmatprep.subr.mxu0 0.0
        %484 = vmatpush1.msra.mxu0 %v449
        %485 = vmatprep.subr.mxu0 0.0
        %486 = vmatpush1.msra.mxu0 0.0
        %487 = vmatprep.subr.mxu0 0.0
        %488 = vmatpush1.msra.mxu0 0.0
        %489 = vmatprep.subr.mxu0 0.0
        %490 = vmatpush1.msra.mxu0 0.0
        %491 = vmatprep.subr.mxu0 0.0
        %492 = vmatpush1.msra.mxu0 0.0
        %493 = vmatprep.subr.mxu0 0.0
        %494 = vmatpush1.msra.mxu0 0.0
        %495 = vmatprep.subr.mxu0 0.0
        %496 = vmatpush1.msra.mxu0 0.0
        %497 = vmatprep.subr.mxu0 0.0
        %498 = vmatpush1.msra.mxu0 0.0
        %499 = vmatprep.subr.mxu0 0.0
        %500 = vmatpush1.msra.mxu0 0.0
        %501 = vmatprep.subr.mxu0 0.0
        %502 = vmatpush1.msra.mxu0 0.0
        %503 = vmatprep.subr.mxu0 0.0
        %504 = vmatpush1.msra.mxu0 0.0
        %505 = vmatprep.subr.mxu0 0.0
        %506 = vmatpush1.msra.mxu0 0.0
        %507 = vmatprep.subr.mxu0 0.0
        %508 = vmatpush1.msra.mxu0 0.0
        %509 = vmatprep.subr.mxu0 0.0
        %510 = vmatpush1.msra.mxu0 0.0
        %511 = vmatprep.subr.mxu0 0.0
        %512 = vmatpush1.msra.mxu0 0.0
        %513 = vmatprep.subr.mxu0 0.0
        %514 = vmatpush1.msra.mxu0 0.0
        %515 = vmatprep.subr.mxu0 0.0
        %516 = vmatpush1.msra.mxu0 0.0
        %517 = vmatprep.subr.mxu0 0.0
        %518 = vmatpush1.msra.mxu0 0.0
        %519 = vmatprep.subr.mxu0 0.0
        %520 = vmatpush1.msra.mxu0 0.0
        %521 = vmatprep.subr.mxu0 0.0
        %522 = vmatpush1.msra.mxu0 0.0
        %523 = vmatprep.subr.mxu0 0.0
        %524 = vmatpush1.msra.mxu0 0.0
        %525 = vmatprep.subr.mxu0 0.0
        %526 = vmatpush1.msra.mxu0 0.0
        %527 = vmatprep.subr.mxu0 0.0
        %528 = vmatpush1.msra.mxu0 0.0
        %529 = vmatprep.subr.mxu0 0.0
        %530 = vmatpush1.msra.mxu0 0.0
        %531 = vmatprep.subr.mxu0 0.0
        %532 = vmatpush1.msra.mxu0 0.0
        %533 = vmatprep.mubr.f32.mxu0 0.0
        %534 = vmatmul.mubr.f32.gmra.mrb[0].mxu0 %v461
        %v535 = vpop.f32.mrb[0].mxu0
        %v536 = vadd.f32 0.0, %v535
        %v537 = vpop.f32.mrb[0].mxu0
        %538 = vmatprep.mubr.f32.mxu0 0.0
        %539 = vmatmul.mubr.f32.gmra.mrb[0].mxu0 %v463
        %v540 = vpop.f32.mrb[0].mxu0
        %v541 = vadd.f32 0.0, %v540
        %v542 = vpop.f32.mrb[0].mxu0
        %543 = vmatprep.mubr.f32.mxu0 0.0
        %544 = vmatmul.mubr.f32.gmra.mrb[0].mxu0 %v465
        %v545 = vpop.f32.mrb[0].mxu0
        %v546 = vadd.f32 0.0, %v545
        %v547 = vpop.f32.mrb[0].mxu0
        %548 = vmatprep.mubr.f32.mxu0 0.0
        %549 = vmatmul.mubr.f32.gmra.mrb[0].mxu0 %v467
        %v550 = vpop.f32.mrb[0].mxu0
        %v551 = vadd.f32 0.0, %v550
        %v552 = vpop.f32.mrb[0].mxu0
        %553 = vdwg.mxu0
        %v554 = vadd.f32 %v437, %v536
        %v555 = vadd.f32 %v438, %v541
        %v556 = vadd.f32 %v439, %v546
        %v557 = vadd.f32 %v440, %v551
        %s558 = scalar_lea.vmem [#allocation2], 128
        %v559 = vld [vmem:[%s558] sm:$0xff]
        %v560 = vld [vmem:[%s558 + $0x8] sm:$0xff]
        %v561 = vld [vmem:[%s558 + $0x10] sm:$0xff]
        %v562 = vld [vmem:[%s558 + $0x18] sm:$0xff]
        %v563 = vld [vmem:[%s558 + $0x20] sm:$0xff]
        %v564 = vld [vmem:[%s558 + $0x28] sm:$0xff]
        %v565 = vld [vmem:[%s558 + $0x30] sm:$0xff]
        %v566 = vld [vmem:[%s558 + $0x38] sm:$0xff]
        %vm567 = vcmask 1045504
        %v568 = vrot.slane %v301, 2
        %v569 = vrot.slane %v306, 2
        %v570 = vsel %vm567, %v568, %v569
        %v571 = vrot.slane %v311, 2
        %v572 = vsel %vm567, %v569, %v571
        %v573 = vrot.slane %v316, 2
        %v574 = vsel %vm567, %v571, %v573
        %v575 = vrot.slane %v321, 2
        %v576 = vsel %vm567, %v573, %v575
        %v577 = vsel %vm339, %v570, 0
        %v579 = vsel %vm339, %v572, 0
        %v581 = vsel %vm339, %v574, 0
        %v583 = vsel %vm339, %v576, 0
        %585 = vmatprep.subr.mxu0 0.0
        %586 = vmatpush1.msra.mxu0 %v559
        %587 = vmatprep.subr.mxu0 0.0
        %588 = vmatpush1.msra.mxu0 %v560
        %589 = vmatprep.subr.mxu0 0.0
        %590 = vmatpush1.msra.mxu0 %v561
        %591 = vmatprep.subr.mxu0 0.0
        %592 = vmatpush1.msra.mxu0 %v562
        %593 = vmatprep.subr.mxu0 0.0
        %594 = vmatpush1.msra.mxu0 %v563
        %595 = vmatprep.subr.mxu0 0.0
        %596 = vmatpush1.msra.mxu0 %v564
        %597 = vmatprep.subr.mxu0 0.0
        %598 = vmatpush1.msra.mxu0 %v565
        %599 = vmatprep.subr.mxu0 0.0
        %600 = vmatpush1.msra.mxu0 %v566
        %601 = vmatprep.subr.mxu0 0.0
        %602 = vmatpush1.msra.mxu0 0.0
        %603 = vmatprep.subr.mxu0 0.0
        %604 = vmatpush1.msra.mxu0 0.0
        %605 = vmatprep.subr.mxu0 0.0
        %606 = vmatpush1.msra.mxu0 0.0
        %607 = vmatprep.subr.mxu0 0.0
        %608 = vmatpush1.msra.mxu0 0.0
        %609 = vmatprep.subr.mxu0 0.0
        %610 = vmatpush1.msra.mxu0 0.0
        %611 = vmatprep.subr.mxu0 0.0
        %612 = vmatpush1.msra.mxu0 0.0
        %613 = vmatprep.subr.mxu0 0.0
        %614 = vmatpush1.msra.mxu0 0.0
        %615 = vmatprep.subr.mxu0 0.0
        %616 = vmatpush1.msra.mxu0 0.0
        %617 = vmatprep.subr.mxu0 0.0
        %618 = vmatpush1.msra.mxu0 0.0
        %619 = vmatprep.subr.mxu0 0.0
        %620 = vmatpush1.msra.mxu0 0.0
        %621 = vmatprep.subr.mxu0 0.0
        %622 = vmatpush1.msra.mxu0 0.0
        %623 = vmatprep.subr.mxu0 0.0
        %624 = vmatpush1.msra.mxu0 0.0
        %625 = vmatprep.subr.mxu0 0.0
        %626 = vmatpush1.msra.mxu0 0.0
        %627 = vmatprep.subr.mxu0 0.0
        %628 = vmatpush1.msra.mxu0 0.0
        %629 = vmatprep.subr.mxu0 0.0
        %630 = vmatpush1.msra.mxu0 0.0
        %631 = vmatprep.subr.mxu0 0.0
        %632 = vmatpush1.msra.mxu0 0.0
        %633 = vmatprep.subr.mxu0 0.0
        %634 = vmatpush1.msra.mxu0 0.0
        %635 = vmatprep.subr.mxu0 0.0
        %636 = vmatpush1.msra.mxu0 0.0
        %637 = vmatprep.subr.mxu0 0.0
        %638 = vmatpush1.msra.mxu0 0.0
        %639 = vmatprep.subr.mxu0 0.0
        %640 = vmatpush1.msra.mxu0 0.0
        %641 = vmatprep.subr.mxu0 0.0
        %642 = vmatpush1.msra.mxu0 0.0
        %643 = vmatprep.subr.mxu0 0.0
        %644 = vmatpush1.msra.mxu0 0.0
        %645 = vmatprep.subr.mxu0 0.0
        %646 = vmatpush1.msra.mxu0 0.0
        %647 = vmatprep.subr.mxu0 0.0
        %648 = vmatpush1.msra.mxu0 0.0
        %649 = vmatprep.mubr.f32.mxu0 0.0
        %650 = vmatmul.mubr.f32.gmra.mrb[0].mxu0 %v577
        %v651 = vpop.f32.mrb[0].mxu0
        %v652 = vadd.f32 0.0, %v651
        %v653 = vpop.f32.mrb[0].mxu0
        %654 = vmatprep.mubr.f32.mxu0 0.0
        %655 = vmatmul.mubr.f32.gmra.mrb[0].mxu0 %v579
        %v656 = vpop.f32.mrb[0].mxu0
        %v657 = vadd.f32 0.0, %v656
        %v658 = vpop.f32.mrb[0].mxu0
        %659 = vmatprep.mubr.f32.mxu0 0.0
        %660 = vmatmul.mubr.f32.gmra.mrb[0].mxu0 %v581
        %v661 = vpop.f32.mrb[0].mxu0
        %v662 = vadd.f32 0.0, %v661
        %v663 = vpop.f32.mrb[0].mxu0
        %664 = vmatprep.mubr.f32.mxu0 0.0
        %665 = vmatmul.mubr.f32.gmra.mrb[0].mxu0 %v583
        %v666 = vpop.f32.mrb[0].mxu0
        %v667 = vadd.f32 0.0, %v666
        %v668 = vpop.f32.mrb[0].mxu0
        %669 = vdwg.mxu0
        %v670 = vadd.f32 %v554, %v652
        %v671 = vadd.f32 %v555, %v657
        %v672 = vadd.f32 %v556, %v662
        %v673 = vadd.f32 %v557, %v667
        %674 = vst [vmem:[%s205] sm:$0xff] %v670
        %675 = vst [vmem:[%s205 + $0x8] sm:$0xff] %v671
        %676 = vst [vmem:[%s205 + $0x10] sm:$0xff] %v672
        %677 = vst [vmem:[%s205 + $0x18] sm:$0xff] %v673
        %s678 = sand.u32 %s116, 1
        %s679 = scalar_lea.sflag [#allocation4], %s678
        %s680 = sand.u32 %s116, 1
        %s681 = smul.addr %s680, 32
        %s682 = scalar_lea.vmem [#allocation5], %s681
        // Predicated region
        $region41: #{tpu_custom_call.1} parent=35 // pred_check
          %p683 = pneg %p126
        $region42: #{tpu_custom_call.1} parent=35 // pred_check_branch
          %685 = sbr.rel (%p683) target = $region44
        $region43: #{tpu_custom_call.1} parent=35 // pred_region
          %s687 = ssub.s32 512, 512
          %688 = vsyncadd %s679, %s687
          %s689 = smul.addr %s19, 4
          %s690 = smul.addr %s689, 128
          %s691 = scalar_lea.hbm %s4, %s690
          %s692 = sshll.u32 %s682, 4
          %s693 = int_to_ptr.vmem [resolvable:$true] %s692
          %698 = dma.vmem_to_hbm [thread:$0]  %s693, 512, %s691, %s679, 128, 128, 8
        $region44: #{tpu_custom_call.1} parent=35 // pred_fallthru
          _
      $region36: #{tpu_custom_call.1} parent=5 // pred_fallthru
        _
      %p699 = scmp.le.s32.totalorder 2, %s14
      // Predicated region
      $region45: #{tpu_custom_call.1} parent=5 // pred_check
        %p700 = pneg %p699
      $region46: #{tpu_custom_call.1} parent=5 // pred_check_branch
        %702 = sbr.rel (%p700) target = $region48
      $region47: #{tpu_custom_call.1} parent=5 // pred_region
        %s703 = ssub.s32 %s14, 2
        // Predicated region
        $region49: #{tpu_custom_call.1} parent=47 // pred_check
          %p704 = pneg %p132
        $region50: #{tpu_custom_call.1} parent=47 // pred_check_branch
          %706 = sbr.rel (%p704) target = $region52
        $region51: #{tpu_custom_call.1} parent=47 // pred_region
          %s707 = sand.u32 %s117, 1
          %s708 = scalar_lea.sflag [#allocation4], %s707
          %s709 = sand.u32 %s117, 1
          %s710 = smul.addr %s709, 32
          %s711 = scalar_lea.vmem [#allocation5], %s710
          %712 = dma.done %s708, 512
        $region52: #{tpu_custom_call.1} parent=47 // pred_fallthru
          _
      $region48: #{tpu_custom_call.1} parent=5 // pred_fallthru
        _
    $region6: #{tpu_custom_call.1} parent=1 // loop_footer
      %s18 = sadd.s32 1, %s14
    $region7: #{tpu_custom_call.1} parent=1 // loop_footer_branch
      %13 = sbr.rel target = $region3
    $region8: #{tpu_custom_call.1} parent=1 // loop_exit
      _
    %713 = vsyncpa [#allocation3], 1
    %s714 = scalar_lea.sflag [#allocation3], 1
    %715 = vsyncpa %s714, 1
    %716 = vsyncpa [#allocation4], 1
    %s717 = scalar_lea.sflag [#allocation4], 1
    %718 = vsyncpa %s717, 1

</llo_original>
